<compile_context>
chip_gen: v6e
topology: v6e:2x2x1
jax: 0.10.0
libtpu: 0.0.40
codegen_flags: <defaults>
</compile_context>

<pallas_src>
import functools

import jax
import jax.numpy as jnp
from jax import lax
from jax.experimental import pallas as pl
from jax.experimental.pallas import tpu as pltpu


def _round_up(x, m):
    return (x + m - 1) // m * m


def _vmem_budget_bytes():
    """Per-generation VMEM budget: ~0.85x physical capacity, <= 100 MiB."""
    try:
        cap = int(pltpu.get_tpu_info().vmem_capacity_bytes)
    except Exception:                       # conservative fallback (v7x-sized)
        cap = 64 * 2**20
    return min(int(0.85 * cap), 100 * 2**20)


def _rnn_rec_kernel(h_ref, w_rec_ref, fr_ref, r_state,
                    *, alpha, leaky, t_blk, activation, unroll):
    """Recurrent core: t_blk timesteps of one batch tile.

    h_ref:     (t_blk, b_tile, r_pad) f32  precomputed drive
                                           (x@W_in + (b_in+b_rec) + n_sd*noise)
    w_rec_ref: (r_pad, r_pad)              resident recurrent weight
    fr_ref:    (t_blk, b_tile, r_pad) f32  firing rates (post-update state)
    r_state:   (b_tile, r_pad)        f32  carried recurrent state (VMEM)
    """
    # Zero the recurrent state at the first time-block of each batch tile.
    @pl.when(pl.program_id(1) == 0)
    def _():
        r_state[...] = jnp.zeros_like(r_state)

    w_rec = w_rec_ref[...]                  # hoisted: loaded once per block

    # TODO(synk): for r_pad <= 256 the RHS could be held resident in the MXU
    # across steps (pltpu.matmul_push_rhs / matmul_acc_lhs / matmul_pop) to cut
    # per-step MXU issue time on the serial chain.
    def step(tt, r):
        h = h_ref[tt] + jnp.dot(r.astype(w_rec.dtype), w_rec,
                                preferred_element_type=jnp.float32)
        if activation == 'relu':
            act = jnp.maximum(h, 0.0)
        else:                               # 'tanh' (EUP)
            act = jnp.tanh(h)
        if leaky:
            r_new = (1.0 - alpha) * r + alpha * act
        else:
            r_new = r + alpha * act
        fr_ref[tt] = r_new
        return r_new

    # Keep r in vregs across the (possibly partially) unrolled block; touch
    # the VMEM scratch only at block boundaries.
    r_final = lax.fori_loop(0, t_blk, step, r_state[...], unroll=unroll)
    r_state[...] = r_final


def prepare_rnn_params(params, rec_size):
    """Pad / cast weights once (hoisted out of the per-call path)."""
    w_in, b_in, w_rec, b_rec, w_out, b_out = params
    f32 = jnp.float32
    inp_size = w_in.shape[0]
    r_pad = _round_up(rec_size, 128)
    # bf16 W_rec only when rec is large enough that the VMEM/BW savings
    # outweigh the compounded per-step rounding through the recurrence.
    rec_dtype = jnp.bfloat16 if r_pad >= 512 else f32
    w_in_p = jnp.zeros((inp_size, r_pad), f32).at[:, :rec_size].set(
        w_in.astype(f32))
    bias_p = jnp.zeros((r_pad,), f32).at[:rec_size].set(
        (b_in + b_rec).astype(f32))                      # pre-summed biases
    w_rec_p = jnp.zeros((r_pad, r_pad), rec_dtype).at[
        :rec_size, :rec_size].set(w_rec.astype(rec_dtype))
    return dict(w_in_p=w_in_p, bias_p=bias_p, w_rec_p=w_rec_p,
                w_out=w_out.astype(f32), b_out=b_out.astype(f32))


def rnn_forward(inp, noise, prepared, *, alpha, n_sd, leaky=True,
                activation='relu'):
    """inp: (batch, seq, inp_size). noise: (seq, rec_size) ~ N(0,1).

    Returns (fr, out): (batch, seq, rec_size), (batch, seq, out_size).
    """
    f32 = jnp.float32
    batch, seq, inp_size = inp.shape
    w_in_p, bias_p = prepared['w_in_p'], prepared['bias_p']
    w_rec_p, w_out, b_out = prepared['w_rec_p'], prepared['w_out'], prepared['b_out']
    rec_size = w_out.shape[0]
    r_pad = w_rec_p.shape[0]

    # ---- per-generation VMEM budget ----------------------------------------
    budget = _vmem_budget_bytes()

    # ---- batch tiling --------------------------------------------------------
    b_pad = _round_up(batch, 8)            # sublane
    # One tile on single-TC chips / small batches; split in two only when the
    # batch can genuinely fill both v7x TensorCores.
    n_b = 2 if (b_pad >= 256 and b_pad % 16 == 0) else 1
    b_tile = b_pad // n_b

    # ---- t_blk derived from the VMEM budget ----------------------------------
    w_rec_bytes = r_pad * r_pad * w_rec_p.dtype.itemsize   # single-buffered
    fixed = w_rec_bytes + b_tile * r_pad * 4                # + r_state scratch
    per_t = 4 * b_tile * r_pad * 4          # double-buffered h_in + fr (f32)
    t_fit = (budget - fixed) // per_t if budget > fixed else 1
    t_blk = int(max(1, min(seq, 64, t_fit)))
    seq_pad = _round_up(seq, t_blk)
    n_t = seq_pad // t_blk

    # ---- unroll gated on vreg pressure ---------------------------------------
    state_bytes = b_tile * r_pad * 4
    if state_bytes <= 32 * 1024:
        unroll = True          # state is a handful of vregs — fully unroll
    elif state_bytes <= 128 * 1024:
        unroll = 4             # partial unroll: LLO visibility without spills
    else:
        unroll = False

    # ---- pad activations / noise ---------------------------------------------
    x_p = jnp.zeros((b_pad, seq_pad, inp_size), f32).at[:batch, :seq].set(
        inp.astype(f32))
    noise_p = jnp.zeros((seq_pad, r_pad), f32).at[:seq, :rec_size].set(
        noise.astype(f32))

    # ---- hoisted input projection (one big MXU matmul, time-major) -----------
    # TODO(synk): on v5e consider fusing this drive into the Pallas kernel (or
    # storing it bf16) to avoid one full f32 HBM round-trip of h_in.
    h_in = (jnp.einsum('bti,ir->tbr', x_p, w_in_p, preferred_element_type=f32)
            + bias_p[None, None, :]
            + n_sd * noise_p[:, None, :])

    bytes_needed = fixed + per_t * t_blk
    vmem_limit = int(min(budget, max(32 * 2**20, bytes_needed + (8 << 20))))

    kernel = functools.partial(_rnn_rec_kernel, alpha=float(alpha),
                               leaky=bool(leaky), t_blk=t_blk,
                               activation=activation, unroll=unroll)

    fr_tm = pl.pallas_call(
        kernel,
        out_shape=jax.ShapeDtypeStruct((seq_pad, b_pad, r_pad), f32),
        grid_spec=pltpu.PrefetchScalarGridSpec(
            num_scalar_prefetch=0,
            grid=(n_b, n_t),
            in_specs=[
                pl.BlockSpec((t_blk, b_tile, r_pad),
                             lambda b, t: (t, b, 0)),           # h_in block
                pl.BlockSpec((r_pad, r_pad), lambda b, t: (0, 0),
                             pipeline_mode=pl.Buffered(buffer_count=1)),
            ],
            out_specs=pl.BlockSpec((t_blk, b_tile, r_pad),
                                   lambda b, t: (t, b, 0)),     # fr block
            scratch_shapes=[pltpu.VMEM((b_tile, r_pad), f32)],  # r state
        ),
        input_output_aliases={0: 0},        # fr overwrites h_in in HBM
        compiler_params=pltpu.CompilerParams(
            dimension_semantics=("parallel", "arbitrary"),
            vmem_limit_bytes=vmem_limit),
    )(h_in, w_rec_p)

    # ---- hoisted output projection on the un-padded slice --------------------
    fr_sel = fr_tm[:seq, :batch, :rec_size]
    out = (jnp.einsum('tbr,ro->bto', fr_sel, w_out, preferred_element_type=f32)
           + b_out[None, None, :])
    # TODO(synk): this transpose is a pure-layout HBM pass; emit a batch-major
    # fr block directly from the kernel if profiling shows it matters (v5e).
    fr = jnp.transpose(fr_sel, (1, 0, 2))
    return fr, out


def _reference(inp, noise, params, *, alpha, n_sd, leaky=True):
    """Pure-JAX (f32) reference mirroring the PyTorch forward."""
    w_in, b_in, w_rec, b_rec, w_out, b_out = params
    batch, seq, _ = inp.shape
    r = jnp.zeros((batch, w_rec.shape[0]), jnp.float32)
    frs, outs = [], []
    for i in range(seq):
        h = (inp[:, i] @ w_in + b_in) + (r @ w_rec + b_rec) + n_sd * noise[i]
        act = jnp.maximum(h, 0.0)
        r = (1.0 - alpha) * r + alpha * act if leaky else r + alpha * act
        frs.append(r)
        outs.append(r @ w_out + b_out)
    return jnp.stack(frs, axis=1), jnp.stack(outs, axis=1)


if __name__ == "__main__":
    # small shapes consistent with the module
    batch, seq = 4, 8
    inp_size, rec_size, out_size = 16, 32, 8
    n_sd, tau, dt = 0.1, 100.0, 10.0
    alpha = dt / tau

    key = jax.random.PRNGKey(0)
    k_x, k_wi, k_bi, k_wr, k_br, k_wo, k_bo, k_n = jax.random.split(key, 8)

    inp = jax.random.normal(k_x, (batch, seq, inp_size), jnp.float32)

    # deterministic parameter init (Linear weight stored as (in, out))
    def lin(kw, kb, fan_in, fan_out):
        bound = 1.0 / jnp.sqrt(fan_in)
        w = jax.random.uniform(kw, (fan_in, fan_out), jnp.float32, -bound, bound)
        b = jax.random.uniform(kb, (fan_out,), jnp.float32, -bound, bound)
        return w, b

    w_in, b_in = lin(k_wi, k_bi, inp_size, rec_size)
    w_rec, b_rec = lin(k_wr, k_br, rec_size, rec_size)
    w_out, b_out = lin(k_wo, k_bo, rec_size, out_size)
    params = (w_in, b_in, w_rec, b_rec, w_out, b_out)

    # TODO(synk): the PyTorch module draws torch.randn(rec_size) per step
    # inside dynamics; here the per-step noise is precomputed deterministically
    # and passed in as an explicit (seq, rec_size) input.
    noise = jax.random.normal(k_n, (seq, rec_size), jnp.float32)

    prepared = prepare_rnn_params(params, rec_size)   # one-time pad/cast
    fwd = jax.jit(functools.partial(rnn_forward, alpha=alpha, n_sd=n_sd,
                                    leaky=True, activation='relu'))
    fr, out = jax.block_until_ready(fwd(inp, noise, prepared))

    fr_ref, out_ref = _reference(inp, noise, params,
                                 alpha=alpha, n_sd=n_sd, leaky=True)
    assert fr.shape == (batch, seq, rec_size)
    assert out.shape == (batch, seq, out_size)
    assert jnp.allclose(fr, fr_ref, atol=1e-2, rtol=1e-2)
    assert jnp.allclose(out, out_ref, atol=1e-2, rtol=1e-2)
    print("KERNEL_OK")
</pallas_src>

<mosaic_0001>
module attributes {stable_mosaic.version = 11 : i64} {
  func.func @_rnn_rec_kernel(%arg0: i32, %arg1: i32, %arg2: memref<8x8x128xf32, #tpu.memory_space<vmem>>, %arg3: memref<128x128xf32, #tpu.memory_space<vmem>>, %arg4: memref<8x8x128xf32, #tpu.memory_space<vmem>>, %arg5: memref<8x128xf32, #tpu.memory_space<vmem>>) attributes {dimension_semantics = [#tpu.dimension_semantics<parallel>, #tpu.dimension_semantics<arbitrary>], iteration_bounds = array<i64: 1, 1>, scalar_prefetch = 0 : i64, scratch_operands = 1 : i64, tpu.core_type = #tpu.core_type<tc>, window_params = [{transform_indices = @transform_0, window_bounds = array<i64: 8, 8, 128>}, {pipeline_mode = #tpu.pipeline_mode<synchronous>, transform_indices = @transform_1, window_bounds = array<i64: 128, 128>}, {transform_indices = @transform_2, window_bounds = array<i64: 8, 8, 128>}]} {
    %c0_i32 = arith.constant 0 : i32
    %0 = arith.cmpi eq, %arg1, %c0_i32 : i32
    %1 = arith.extui %0 : i1 to i32
    %c0_i32_0 = arith.constant 0 : i32
    %2 = arith.cmpi ne, %1, %c0_i32_0 : i32
    scf.if %2 {
      %cst_70 = arith.constant 0.000000e+00 : f32
      %134 = vector.broadcast %cst_70 : f32 to vector<8x128xf32>
      %c0_71 = arith.constant 0 : index
      %c0_72 = arith.constant 0 : index
      %135 = vector.load %arg5[%c0_71, %c0_72] : memref<8x128xf32, #tpu.memory_space<vmem>>, vector<8x128xf32>
      tpu.vector_store %arg5[%c0_71, %c0_72], %134 {strides = array<i32>} : memref<8x128xf32, #tpu.memory_space<vmem>>, vector<8x128xf32>,
    } else {
    }
    %c0 = arith.constant 0 : index
    %c0_1 = arith.constant 0 : index
    %3 = vector.load %arg3[%c0, %c0_1] : memref<128x128xf32, #tpu.memory_space<vmem>>, vector<128x128xf32>
    %c0_2 = arith.constant 0 : index
    %c0_3 = arith.constant 0 : index
    %4 = vector.load %arg5[%c0_2, %c0_3] : memref<8x128xf32, #tpu.memory_space<vmem>>, vector<8x128xf32>
    %c0_i32_4 = arith.constant 0 : i32
    %5 = arith.index_cast %c0_i32_4 : i32 to index
    %c0_5 = arith.constant 0 : index
    %c0_6 = arith.constant 0 : index
    %6 = vector.load %arg2[%5, %c0_5, %c0_6] : memref<8x8x128xf32, #tpu.memory_space<vmem>>, vector<1x8x128xf32>
    %7 = vector.shape_cast %6 : vector<1x8x128xf32> to vector<8x128xf32>
    %cst = arith.constant dense<0.000000e+00> : vector<8x128xf32>
    %8 = tpu.matmul %4, %3, %cst {dimension_numbers = #tpu.dot_dimension_numbers<[1], [0], [0], [1], [0, 0, 1, 1], [], []>} : vector<8x128xf32>, vector<128x128xf32>, vector<8x128xf32> -> vector<8x128xf32>
    %9 = arith.addf %7, %8 : vector<8x128xf32>
    %cst_7 = arith.constant 0.000000e+00 : f32
    %10 = vector.broadcast %cst_7 : f32 to vector<8x128xf32>
    %11 = arith.maximumf %9, %10 : vector<8x128xf32>
    %cst_8 = arith.constant 0.899999976 : f32
    %12 = vector.broadcast %cst_8 : f32 to vector<8x128xf32>
    %13 = arith.mulf %12, %4 : vector<8x128xf32>
    %cst_9 = arith.constant 1.000000e-01 : f32
    %14 = vector.broadcast %cst_9 : f32 to vector<8x128xf32>
    %15 = arith.mulf %14, %11 : vector<8x128xf32>
    %16 = arith.addf %13, %15 : vector<8x128xf32>
    %17 = arith.index_cast %c0_i32_4 : i32 to index
    %c0_10 = arith.constant 0 : index
    %c0_11 = arith.constant 0 : index
    %18 = vector.load %arg4[%17, %c0_10, %c0_11] : memref<8x8x128xf32, #tpu.memory_space<vmem>>, vector<1x8x128xf32>
    %19 = vector.shape_cast %18 : vector<1x8x128xf32> to vector<8x128xf32>
    %20 = vector.shape_cast %16 : vector<8x128xf32> to vector<1x8x128xf32>
    tpu.vector_store %arg4[%17, %c0_10, %c0_11], %20 {strides = array<i32>} : memref<8x8x128xf32, #tpu.memory_space<vmem>>, vector<1x8x128xf32>,
    %c1_i32 = arith.constant 1 : i32
    %21 = arith.index_cast %c1_i32 : i32 to index
    %c0_12 = arith.constant 0 : index
    %c0_13 = arith.constant 0 : index
    %22 = vector.load %arg2[%21, %c0_12, %c0_13] : memref<8x8x128xf32, #tpu.memory_space<vmem>>, vector<1x8x128xf32>
    %23 = vector.shape_cast %22 : vector<1x8x128xf32> to vector<8x128xf32>
    %cst_14 = arith.constant dense<0.000000e+00> : vector<8x128xf32>
    %24 = tpu.matmul %16, %3, %cst_14 {dimension_numbers = #tpu.dot_dimension_numbers<[1], [0], [0], [1], [0, 0, 1, 1], [], []>} : vector<8x128xf32>, vector<128x128xf32>, vector<8x128xf32> -> vector<8x128xf32>
    %25 = arith.addf %23, %24 : vector<8x128xf32>
    %cst_15 = arith.constant 0.000000e+00 : f32
    %26 = vector.broadcast %cst_15 : f32 to vector<8x128xf32>
    %27 = arith.maximumf %25, %26 : vector<8x128xf32>
    %cst_16 = arith.constant 0.899999976 : f32
    %28 = vector.broadcast %cst_16 : f32 to vector<8x128xf32>
    %29 = arith.mulf %28, %16 : vector<8x128xf32>
    %cst_17 = arith.constant 1.000000e-01 : f32
    %30 = vector.broadcast %cst_17 : f32 to vector<8x128xf32>
    %31 = arith.mulf %30, %27 : vector<8x128xf32>
    %32 = arith.addf %29, %31 : vector<8x128xf32>
    %33 = arith.index_cast %c1_i32 : i32 to index
    %c0_18 = arith.constant 0 : index
    %c0_19 = arith.constant 0 : index
    %34 = vector.load %arg4[%33, %c0_18, %c0_19] : memref<8x8x128xf32, #tpu.memory_space<vmem>>, vector<1x8x128xf32>
    %35 = vector.shape_cast %34 : vector<1x8x128xf32> to vector<8x128xf32>
    %36 = vector.shape_cast %32 : vector<8x128xf32> to vector<1x8x128xf32>
    tpu.vector_store %arg4[%33, %c0_18, %c0_19], %36 {strides = array<i32>} : memref<8x8x128xf32, #tpu.memory_space<vmem>>, vector<1x8x128xf32>,
    %c2_i32 = arith.constant 2 : i32
    %37 = arith.index_cast %c2_i32 : i32 to index
    %c0_20 = arith.constant 0 : index
    %c0_21 = arith.constant 0 : index
    %38 = vector.load %arg2[%37, %c0_20, %c0_21] : memref<8x8x128xf32, #tpu.memory_space<vmem>>, vector<1x8x128xf32>
    %39 = vector.shape_cast %38 : vector<1x8x128xf32> to vector<8x128xf32>
    %cst_22 = arith.constant dense<0.000000e+00> : vector<8x128xf32>
    %40 = tpu.matmul %32, %3, %cst_22 {dimension_numbers = #tpu.dot_dimension_numbers<[1], [0], [0], [1], [0, 0, 1, 1], [], []>} : vector<8x128xf32>, vector<128x128xf32>, vector<8x128xf32> -> vector<8x128xf32>
    %41 = arith.addf %39, %40 : vector<8x128xf32>
    %cst_23 = arith.constant 0.000000e+00 : f32
    %42 = vector.broadcast %cst_23 : f32 to vector<8x128xf32>
    %43 = arith.maximumf %41, %42 : vector<8x128xf32>
    %cst_24 = arith.constant 0.899999976 : f32
    %44 = vector.broadcast %cst_24 : f32 to vector<8x128xf32>
    %45 = arith.mulf %44, %32 : vector<8x128xf32>
    %cst_25 = arith.constant 1.000000e-01 : f32
    %46 = vector.broadcast %cst_25 : f32 to vector<8x128xf32>
    %47 = arith.mulf %46, %43 : vector<8x128xf32>
    %48 = arith.addf %45, %47 : vector<8x128xf32>
    %49 = arith.index_cast %c2_i32 : i32 to index
    %c0_26 = arith.constant 0 : index
    %c0_27 = arith.constant 0 : index
    %50 = vector.load %arg4[%49, %c0_26, %c0_27] : memref<8x8x128xf32, #tpu.memory_space<vmem>>, vector<1x8x128xf32>
    %51 = vector.shape_cast %50 : vector<1x8x128xf32> to vector<8x128xf32>
    %52 = vector.shape_cast %48 : vector<8x128xf32> to vector<1x8x128xf32>
    tpu.vector_store %arg4[%49, %c0_26, %c0_27], %52 {strides = array<i32>} : memref<8x8x128xf32, #tpu.memory_space<vmem>>, vector<1x8x128xf32>,
    %c3_i32 = arith.constant 3 : i32
    %53 = arith.index_cast %c3_i32 : i32 to index
    %c0_28 = arith.constant 0 : index
    %c0_29 = arith.constant 0 : index
    %54 = vector.load %arg2[%53, %c0_28, %c0_29] : memref<8x8x128xf32, #tpu.memory_space<vmem>>, vector<1x8x128xf32>
    %55 = vector.shape_cast %54 : vector<1x8x128xf32> to vector<8x128xf32>
    %cst_30 = arith.constant dense<0.000000e+00> : vector<8x128xf32>
    %56 = tpu.matmul %48, %3, %cst_30 {dimension_numbers = #tpu.dot_dimension_numbers<[1], [0], [0], [1], [0, 0, 1, 1], [], []>} : vector<8x128xf32>, vector<128x128xf32>, vector<8x128xf32> -> vector<8x128xf32>
    %57 = arith.addf %55, %56 : vector<8x128xf32>
    %cst_31 = arith.constant 0.000000e+00 : f32
    %58 = vector.broadcast %cst_31 : f32 to vector<8x128xf32>
    %59 = arith.maximumf %57, %58 : vector<8x128xf32>
    %cst_32 = arith.constant 0.899999976 : f32
    %60 = vector.broadcast %cst_32 : f32 to vector<8x128xf32>
    %61 = arith.mulf %60, %48 : vector<8x128xf32>
    %cst_33 = arith.constant 1.000000e-01 : f32
    %62 = vector.broadcast %cst_33 : f32 to vector<8x128xf32>
    %63 = arith.mulf %62, %59 : vector<8x128xf32>
    %64 = arith.addf %61, %63 : vector<8x128xf32>
    %65 = arith.index_cast %c3_i32 : i32 to index
    %c0_34 = arith.constant 0 : index
    %c0_35 = arith.constant 0 : index
    %66 = vector.load %arg4[%65, %c0_34, %c0_35] : memref<8x8x128xf32, #tpu.memory_space<vmem>>, vector<1x8x128xf32>
    %67 = vector.shape_cast %66 : vector<1x8x128xf32> to vector<8x128xf32>
    %68 = vector.shape_cast %64 : vector<8x128xf32> to vector<1x8x128xf32>
    tpu.vector_store %arg4[%65, %c0_34, %c0_35], %68 {strides = array<i32>} : memref<8x8x128xf32, #tpu.memory_space<vmem>>, vector<1x8x128xf32>,
    %c4_i32 = arith.constant 4 : i32
    %69 = arith.index_cast %c4_i32 : i32 to index
    %c0_36 = arith.constant 0 : index
    %c0_37 = arith.constant 0 : index
    %70 = vector.load %arg2[%69, %c0_36, %c0_37] : memref<8x8x128xf32, #tpu.memory_space<vmem>>, vector<1x8x128xf32>
    %71 = vector.shape_cast %70 : vector<1x8x128xf32> to vector<8x128xf32>
    %cst_38 = arith.constant dense<0.000000e+00> : vector<8x128xf32>
    %72 = tpu.matmul %64, %3, %cst_38 {dimension_numbers = #tpu.dot_dimension_numbers<[1], [0], [0], [1], [0, 0, 1, 1], [], []>} : vector<8x128xf32>, vector<128x128xf32>, vector<8x128xf32> -> vector<8x128xf32>
    %73 = arith.addf %71, %72 : vector<8x128xf32>
    %cst_39 = arith.constant 0.000000e+00 : f32
    %74 = vector.broadcast %cst_39 : f32 to vector<8x128xf32>
    %75 = arith.maximumf %73, %74 : vector<8x128xf32>
    %cst_40 = arith.constant 0.899999976 : f32
    %76 = vector.broadcast %cst_40 : f32 to vector<8x128xf32>
    %77 = arith.mulf %76, %64 : vector<8x128xf32>
    %cst_41 = arith.constant 1.000000e-01 : f32
    %78 = vector.broadcast %cst_41 : f32 to vector<8x128xf32>
    %79 = arith.mulf %78, %75 : vector<8x128xf32>
    %80 = arith.addf %77, %79 : vector<8x128xf32>
    %81 = arith.index_cast %c4_i32 : i32 to index
    %c0_42 = arith.constant 0 : index
    %c0_43 = arith.constant 0 : index
    %82 = vector.load %arg4[%81, %c0_42, %c0_43] : memref<8x8x128xf32, #tpu.memory_space<vmem>>, vector<1x8x128xf32>
    %83 = vector.shape_cast %82 : vector<1x8x128xf32> to vector<8x128xf32>
    %84 = vector.shape_cast %80 : vector<8x128xf32> to vector<1x8x128xf32>
    tpu.vector_store %arg4[%81, %c0_42, %c0_43], %84 {strides = array<i32>} : memref<8x8x128xf32, #tpu.memory_space<vmem>>, vector<1x8x128xf32>,
    %c5_i32 = arith.constant 5 : i32
    %85 = arith.index_cast %c5_i32 : i32 to index
    %c0_44 = arith.constant 0 : index
    %c0_45 = arith.constant 0 : index
    %86 = vector.load %arg2[%85, %c0_44, %c0_45] : memref<8x8x128xf32, #tpu.memory_space<vmem>>, vector<1x8x128xf32>
    %87 = vector.shape_cast %86 : vector<1x8x128xf32> to vector<8x128xf32>
    %cst_46 = arith.constant dense<0.000000e+00> : vector<8x128xf32>
    %88 = tpu.matmul %80, %3, %cst_46 {dimension_numbers = #tpu.dot_dimension_numbers<[1], [0], [0], [1], [0, 0, 1, 1], [], []>} : vector<8x128xf32>, vector<128x128xf32>, vector<8x128xf32> -> vector<8x128xf32>
    %89 = arith.addf %87, %88 : vector<8x128xf32>
    %cst_47 = arith.constant 0.000000e+00 : f32
    %90 = vector.broadcast %cst_47 : f32 to vector<8x128xf32>
    %91 = arith.maximumf %89, %90 : vector<8x128xf32>
    %cst_48 = arith.constant 0.899999976 : f32
    %92 = vector.broadcast %cst_48 : f32 to vector<8x128xf32>
    %93 = arith.mulf %92, %80 : vector<8x128xf32>
    %cst_49 = arith.constant 1.000000e-01 : f32
    %94 = vector.broadcast %cst_49 : f32 to vector<8x128xf32>
    %95 = arith.mulf %94, %91 : vector<8x128xf32>
    %96 = arith.addf %93, %95 : vector<8x128xf32>
    %97 = arith.index_cast %c5_i32 : i32 to index
    %c0_50 = arith.constant 0 : index
    %c0_51 = arith.constant 0 : index
    %98 = vector.load %arg4[%97, %c0_50, %c0_51] : memref<8x8x128xf32, #tpu.memory_space<vmem>>, vector<1x8x128xf32>
    %99 = vector.shape_cast %98 : vector<1x8x128xf32> to vector<8x128xf32>
    %100 = vector.shape_cast %96 : vector<8x128xf32> to vector<1x8x128xf32>
    tpu.vector_store %arg4[%97, %c0_50, %c0_51], %100 {strides = array<i32>} : memref<8x8x128xf32, #tpu.memory_space<vmem>>, vector<1x8x128xf32>,
    %c6_i32 = arith.constant 6 : i32
    %101 = arith.index_cast %c6_i32 : i32 to index
    %c0_52 = arith.constant 0 : index
    %c0_53 = arith.constant 0 : index
    %102 = vector.load %arg2[%101, %c0_52, %c0_53] : memref<8x8x128xf32, #tpu.memory_space<vmem>>, vector<1x8x128xf32>
    %103 = vector.shape_cast %102 : vector<1x8x128xf32> to vector<8x128xf32>
    %cst_54 = arith.constant dense<0.000000e+00> : vector<8x128xf32>
    %104 = tpu.matmul %96, %3, %cst_54 {dimension_numbers = #tpu.dot_dimension_numbers<[1], [0], [0], [1], [0, 0, 1, 1], [], []>} : vector<8x128xf32>, vector<128x128xf32>, vector<8x128xf32> -> vector<8x128xf32>
    %105 = arith.addf %103, %104 : vector<8x128xf32>
    %cst_55 = arith.constant 0.000000e+00 : f32
    %106 = vector.broadcast %cst_55 : f32 to vector<8x128xf32>
    %107 = arith.maximumf %105, %106 : vector<8x128xf32>
    %cst_56 = arith.constant 0.899999976 : f32
    %108 = vector.broadcast %cst_56 : f32 to vector<8x128xf32>
    %109 = arith.mulf %108, %96 : vector<8x128xf32>
    %cst_57 = arith.constant 1.000000e-01 : f32
    %110 = vector.broadcast %cst_57 : f32 to vector<8x128xf32>
    %111 = arith.mulf %110, %107 : vector<8x128xf32>
    %112 = arith.addf %109, %111 : vector<8x128xf32>
    %113 = arith.index_cast %c6_i32 : i32 to index
    %c0_58 = arith.constant 0 : index
    %c0_59 = arith.constant 0 : index
    %114 = vector.load %arg4[%113, %c0_58, %c0_59] : memref<8x8x128xf32, #tpu.memory_space<vmem>>, vector<1x8x128xf32>
    %115 = vector.shape_cast %114 : vector<1x8x128xf32> to vector<8x128xf32>
    %116 = vector.shape_cast %112 : vector<8x128xf32> to vector<1x8x128xf32>
    tpu.vector_store %arg4[%113, %c0_58, %c0_59], %116 {strides = array<i32>} : memref<8x8x128xf32, #tpu.memory_space<vmem>>, vector<1x8x128xf32>,
    %c7_i32 = arith.constant 7 : i32
    %117 = arith.index_cast %c7_i32 : i32 to index
    %c0_60 = arith.constant 0 : index
    %c0_61 = arith.constant 0 : index
    %118 = vector.load %arg2[%117, %c0_60, %c0_61] : memref<8x8x128xf32, #tpu.memory_space<vmem>>, vector<1x8x128xf32>
    %119 = vector.shape_cast %118 : vector<1x8x128xf32> to vector<8x128xf32>
    %cst_62 = arith.constant dense<0.000000e+00> : vector<8x128xf32>
    %120 = tpu.matmul %112, %3, %cst_62 {dimension_numbers = #tpu.dot_dimension_numbers<[1], [0], [0], [1], [0, 0, 1, 1], [], []>} : vector<8x128xf32>, vector<128x128xf32>, vector<8x128xf32> -> vector<8x128xf32>
    %121 = arith.addf %119, %120 : vector<8x128xf32>
    %cst_63 = arith.constant 0.000000e+00 : f32
    %122 = vector.broadcast %cst_63 : f32 to vector<8x128xf32>
    %123 = arith.maximumf %121, %122 : vector<8x128xf32>
    %cst_64 = arith.constant 0.899999976 : f32
    %124 = vector.broadcast %cst_64 : f32 to vector<8x128xf32>
    %125 = arith.mulf %124, %112 : vector<8x128xf32>
    %cst_65 = arith.constant 1.000000e-01 : f32
    %126 = vector.broadcast %cst_65 : f32 to vector<8x128xf32>
    %127 = arith.mulf %126, %123 : vector<8x128xf32>
    %128 = arith.addf %125, %127 : vector<8x128xf32>
    %129 = arith.index_cast %c7_i32 : i32 to index
    %c0_66 = arith.constant 0 : index
    %c0_67 = arith.constant 0 : index
    %130 = vector.load %arg4[%129, %c0_66, %c0_67] : memref<8x8x128xf32, #tpu.memory_space<vmem>>, vector<1x8x128xf32>
    %131 = vector.shape_cast %130 : vector<1x8x128xf32> to vector<8x128xf32>
    %132 = vector.shape_cast %128 : vector<8x128xf32> to vector<1x8x128xf32>
    tpu.vector_store %arg4[%129, %c0_66, %c0_67], %132 {strides = array<i32>} : memref<8x8x128xf32, #tpu.memory_space<vmem>>, vector<1x8x128xf32>,
    %c8_i32 = arith.constant 8 : i32
    %c0_68 = arith.constant 0 : index
    %c0_69 = arith.constant 0 : index
    %133 = vector.load %arg5[%c0_68, %c0_69] : memref<8x128xf32, #tpu.memory_space<vmem>>, vector<8x128xf32>
    tpu.vector_store %arg5[%c0_68, %c0_69], %128 {strides = array<i32>} : memref<8x128xf32, #tpu.memory_space<vmem>>, vector<8x128xf32>,
    return
  }
  func.func @transform_0(%arg0: i32, %arg1: i32) -> (i32, i32, i32) {
    %c0_i32 = arith.constant 0 : i32
    %c0_i32_0 = arith.constant 0 : i32
    return %arg1, %arg0, %c0_i32 : i32, i32, i32
  }
  func.func @transform_1(%arg0: i32, %arg1: i32) -> (i32, i32) {
    %c0_i32 = arith.constant 0 : i32
    %c0_i32_0 = arith.constant 0 : i32
    %c0_i32_1 = arith.constant 0 : i32
    return %c0_i32, %c0_i32_0 : i32, i32
  }
  func.func @transform_2(%arg0: i32, %arg1: i32) -> (i32, i32, i32) {
    %c0_i32 = arith.constant 0 : i32
    %c0_i32_0 = arith.constant 0 : i32
    return %arg1, %arg0, %c0_i32 : i32, i32, i32
  }
}

</mosaic_0001>

<llo_original>
// kernel: rnn_forward.1
$region0: #{rnn_forward.1}
  #allocation0 [shape = 'u32[]', space=smem, size = 0x4, offset = 0x4, fixed_abs, tag = 'smem constant byte address 0x4 - core index']
  #allocation1 [shape = 'u32[144,128]{1,0:T(1,128)}', space=vmem, size = 0x12000, scoped, tag = 'internal scratch']
  #allocation2 [shape = 'f32[8,128]{1,0:T(8,128)}', space=vmem, size = 0x1000, scoped, tag = 'scratch operand']
  %s0 = inlined_call_operand.vmem [shape: f32[8,8,128], index: 0, kind: input, shape index: {}, may-alias: {0,2}]
  %s1 = inlined_call_operand.vmem [shape: f32[128,128], index: 1, kind: input, shape index: {}]
  %s2 = inlined_call_operand.vmem [shape: f32[8,8,128], index: 2, kind: output, shape index: {}, may-alias: {0,2}]
  %s3 = sld [smem:[#allocation0]]
  $region22: #{rnn_forward.1} parent=0
    _
  %s5 = ssub.s32 1, %s3
  %s6 = scalar_select 0, %s5, %s3
  // Predicated region
  $region2: #{rnn_forward.1} parent=0 // pred_check
    _
  $region3: #{rnn_forward.1} parent=0 // pred_check_branch
    %8 = sbr.rel (0) target = $region5
  $region4: #{rnn_forward.1} parent=0 // pred_region
    _
  $region5: #{rnn_forward.1} parent=0 // pred_fallthru
    _
  // Predicated region
  $region6: #{rnn_forward.1} parent=0 // pred_check
    _
  $region7: #{rnn_forward.1} parent=0 // pred_check_branch
    %10 = sbr.rel (0) target = $region9
  $region8: #{rnn_forward.1} parent=0 // pred_region
    _
  $region9: #{rnn_forward.1} parent=0 // pred_fallthru
    _
  %p11 = scmp.eq.s32.totalorder 0, 0
  // Predicated region
  $region10: #{rnn_forward.1} parent=0 // pred_check
    %p12 = pneg %p11
  $region11: #{rnn_forward.1} parent=0 // pred_check_branch
    %14 = sbr.rel (%p12) target = $region13
  $region12: #{rnn_forward.1} parent=0 // pred_region
    %15 = vst [vmem:[#allocation2] sm:$0xff] 0.0
  $region13: #{rnn_forward.1} parent=0 // pred_fallthru
    _
  %v16 = vld [vmem:[%s1] sm:$0xff]
  %v17 = vld [vmem:[%s1 + $0x8] sm:$0xff]
  %v18 = vld [vmem:[%s1 + $0x10] sm:$0xff]
  %v19 = vld [vmem:[%s1 + $0x18] sm:$0xff]
  %v20 = vld [vmem:[%s1 + $0x20] sm:$0xff]
  %v21 = vld [vmem:[%s1 + $0x28] sm:$0xff]
  %v22 = vld [vmem:[%s1 + $0x30] sm:$0xff]
  %v23 = vld [vmem:[%s1 + $0x38] sm:$0xff]
  %v24 = vld [vmem:[%s1 + $0x40] sm:$0xff]
  %v25 = vld [vmem:[%s1 + $0x48] sm:$0xff]
  %v26 = vld [vmem:[%s1 + $0x50] sm:$0xff]
  %v27 = vld [vmem:[%s1 + $0x58] sm:$0xff]
  %v28 = vld [vmem:[%s1 + $0x60] sm:$0xff]
  %v29 = vld [vmem:[%s1 + $0x68] sm:$0xff]
  %v30 = vld [vmem:[%s1 + $0x70] sm:$0xff]
  %v31 = vld [vmem:[%s1 + $0x78] sm:$0xff]
  %v32 = vld [vmem:[#allocation2] sm:$0xff]
  %v33 = vld [vmem:[%s0] sm:$0xff]
  %34 = vmatprep.subr.mxu0 0.0
  %35 = vmatpush1.msra.mxu0 %v31
  %36 = vmatprep.subr.mxu0 0.0
  %37 = vmatpush1.msra.mxu0 %v30
  %38 = vmatprep.subr.mxu0 0.0
  %39 = vmatpush1.msra.mxu0 %v29
  %40 = vmatprep.subr.mxu0 0.0
  %41 = vmatpush1.msra.mxu0 %v28
  %42 = vmatprep.subr.mxu0 0.0
  %43 = vmatpush1.msra.mxu0 %v27
  %44 = vmatprep.subr.mxu0 0.0
  %45 = vmatpush1.msra.mxu0 %v26
  %46 = vmatprep.subr.mxu0 0.0
  %47 = vmatpush1.msra.mxu0 %v25
  %48 = vmatprep.subr.mxu0 0.0
  %49 = vmatpush1.msra.mxu0 %v24
  %50 = vmatprep.subr.mxu0 0.0
  %51 = vmatpush1.msra.mxu0 %v23
  %52 = vmatprep.subr.mxu0 0.0
  %53 = vmatpush1.msra.mxu0 %v22
  %54 = vmatprep.subr.mxu0 0.0
  %55 = vmatpush1.msra.mxu0 %v21
  %56 = vmatprep.subr.mxu0 0.0
  %57 = vmatpush1.msra.mxu0 %v20
  %58 = vmatprep.subr.mxu0 0.0
  %59 = vmatpush1.msra.mxu0 %v19
  %60 = vmatprep.subr.mxu0 0.0
  %61 = vmatpush1.msra.mxu0 %v18
  %62 = vmatprep.subr.mxu0 0.0
  %63 = vmatpush1.msra.mxu0 %v17
  %64 = vmatprep.subr.mxu0 0.0
  %65 = vmatpush1.msra.mxu0 %v16
  %66 = vmatprep.subr.mxu0 0.0
  %67 = vmatpush2.msra.mxu0 0.0
  %68 = vmatprep.subr.mxu0 0.0
  %69 = vmatpush2.msra.mxu0 0.0
  %70 = vmatprep.subr.mxu0 0.0
  %71 = vmatpush2.msra.mxu0 0.0
  %72 = vmatprep.subr.mxu0 0.0
  %73 = vmatpush2.msra.mxu0 0.0
  %74 = vmatprep.subr.mxu0 0.0
  %75 = vmatpush2.msra.mxu0 0.0
  %76 = vmatprep.subr.mxu0 0.0
  %77 = vmatpush2.msra.mxu0 0.0
  %78 = vmatprep.subr.mxu0 0.0
  %79 = vmatpush2.msra.mxu0 0.0
  %80 = vmatprep.subr.mxu0 0.0
  %81 = vmatpush2.msra.mxu0 0.0
  %82 = vmatprep.subr.mxu0 0.0
  %83 = vmatpush2.msra.mxu0 0.0
  %84 = vmatprep.subr.mxu0 0.0
  %85 = vmatpush2.msra.mxu0 0.0
  %86 = vmatprep.subr.mxu0 0.0
  %87 = vmatpush2.msra.mxu0 0.0
  %88 = vmatprep.subr.mxu0 0.0
  %89 = vmatpush2.msra.mxu0 0.0
  %90 = vmatprep.subr.mxu0 0.0
  %91 = vmatpush2.msra.mxu0 0.0
  %92 = vmatprep.subr.mxu0 0.0
  %93 = vmatpush2.msra.mxu0 0.0
  %94 = vmatprep.subr.mxu0 0.0
  %95 = vmatpush2.msra.mxu0 0.0
  %96 = vmatprep.subr.mxu0 0.0
  %97 = vmatpush2.msra.mxu0 0.0
  %98 = vmatprep.mubr.f32.mxu0 0.0
  %99 = vmatmul.mubr.f32.gmra.mxu0 %v32
  %v100 = vpop.f32.mrf.mxu0
  %v101 = vadd.f32 0.0, %v100
  %v102 = vpop.f32.mrf.mxu0
  %103 = vdwg.mxu0
  %v104 = vadd.f32 %v33, %v101
  %v105 = vmax.f32 %v104, 0.0
  %v106 = vmul.f32 %v32, 0.9
  %v107 = vmul.f32 %v105, 0.1
  %v108 = vadd.f32 %v106, %v107
  %109 = vst [vmem:[%s2] sm:$0xff] %v108
  %s110 = scalar_lea.vmem %s0, 8
  %v111 = vld [vmem:[%s110] sm:$0xff]
  %112 = vmatprep.subr.mxu0 0.0
  %113 = vmatpush1.msra.mxu0 %v31
  %114 = vmatprep.subr.mxu0 0.0
  %115 = vmatpush1.msra.mxu0 %v30
  %116 = vmatprep.subr.mxu0 0.0
  %117 = vmatpush1.msra.mxu0 %v29
  %118 = vmatprep.subr.mxu0 0.0
  %119 = vmatpush1.msra.mxu0 %v28
  %120 = vmatprep.subr.mxu0 0.0
  %121 = vmatpush1.msra.mxu0 %v27
  %122 = vmatprep.subr.mxu0 0.0
  %123 = vmatpush1.msra.mxu0 %v26
  %124 = vmatprep.subr.mxu0 0.0
  %125 = vmatpush1.msra.mxu0 %v25
  %126 = vmatprep.subr.mxu0 0.0
  %127 = vmatpush1.msra.mxu0 %v24
  %128 = vmatprep.subr.mxu0 0.0
  %129 = vmatpush1.msra.mxu0 %v23
  %130 = vmatprep.subr.mxu0 0.0
  %131 = vmatpush1.msra.mxu0 %v22
  %132 = vmatprep.subr.mxu0 0.0
  %133 = vmatpush1.msra.mxu0 %v21
  %134 = vmatprep.subr.mxu0 0.0
  %135 = vmatpush1.msra.mxu0 %v20
  %136 = vmatprep.subr.mxu0 0.0
  %137 = vmatpush1.msra.mxu0 %v19
  %138 = vmatprep.subr.mxu0 0.0
  %139 = vmatpush1.msra.mxu0 %v18
  %140 = vmatprep.subr.mxu0 0.0
  %141 = vmatpush1.msra.mxu0 %v17
  %142 = vmatprep.subr.mxu0 0.0
  %143 = vmatpush1.msra.mxu0 %v16
  %144 = vmatprep.subr.mxu0 0.0
  %145 = vmatpush2.msra.mxu0 0.0
  %146 = vmatprep.subr.mxu0 0.0
  %147 = vmatpush2.msra.mxu0 0.0
  %148 = vmatprep.subr.mxu0 0.0
  %149 = vmatpush2.msra.mxu0 0.0
  %150 = vmatprep.subr.mxu0 0.0
  %151 = vmatpush2.msra.mxu0 0.0
  %152 = vmatprep.subr.mxu0 0.0
  %153 = vmatpush2.msra.mxu0 0.0
  %154 = vmatprep.subr.mxu0 0.0
  %155 = vmatpush2.msra.mxu0 0.0
  %156 = vmatprep.subr.mxu0 0.0
  %157 = vmatpush2.msra.mxu0 0.0
  %158 = vmatprep.subr.mxu0 0.0
  %159 = vmatpush2.msra.mxu0 0.0
  %160 = vmatprep.subr.mxu0 0.0
  %161 = vmatpush2.msra.mxu0 0.0
  %162 = vmatprep.subr.mxu0 0.0
  %163 = vmatpush2.msra.mxu0 0.0
  %164 = vmatprep.subr.mxu0 0.0
  %165 = vmatpush2.msra.mxu0 0.0
  %166 = vmatprep.subr.mxu0 0.0
  %167 = vmatpush2.msra.mxu0 0.0
  %168 = vmatprep.subr.mxu0 0.0
  %169 = vmatpush2.msra.mxu0 0.0
  %170 = vmatprep.subr.mxu0 0.0
  %171 = vmatpush2.msra.mxu0 0.0
  %172 = vmatprep.subr.mxu0 0.0
  %173 = vmatpush2.msra.mxu0 0.0
  %174 = vmatprep.subr.mxu0 0.0
  %175 = vmatpush2.msra.mxu0 0.0
  %176 = vmatprep.mubr.f32.mxu0 0.0
  %177 = vmatmul.mubr.f32.gmra.mxu0 %v108
  %v178 = vpop.f32.mrf.mxu0
  %v179 = vadd.f32 0.0, %v178
  %v180 = vpop.f32.mrf.mxu0
  %181 = vdwg.mxu0
  %v182 = vadd.f32 %v111, %v179
  %v183 = vmax.f32 %v182, 0.0
  %v184 = vmul.f32 %v108, 0.9
  %v185 = vmul.f32 %v183, 0.1
  %v186 = vadd.f32 %v184, %v185
  %s187 = scalar_lea.vmem %s2, 8
  %188 = vst [vmem:[%s187] sm:$0xff] %v186
  %s189 = scalar_lea.vmem %s0, 16
  %v190 = vld [vmem:[%s189] sm:$0xff]
  %191 = vmatprep.subr.mxu0 0.0
  %192 = vmatpush1.msra.mxu0 %v31
  %193 = vmatprep.subr.mxu0 0.0
  %194 = vmatpush1.msra.mxu0 %v30
  %195 = vmatprep.subr.mxu0 0.0
  %196 = vmatpush1.msra.mxu0 %v29
  %197 = vmatprep.subr.mxu0 0.0
  %198 = vmatpush1.msra.mxu0 %v28
  %199 = vmatprep.subr.mxu0 0.0
  %200 = vmatpush1.msra.mxu0 %v27
  %201 = vmatprep.subr.mxu0 0.0
  %202 = vmatpush1.msra.mxu0 %v26
  %203 = vmatprep.subr.mxu0 0.0
  %204 = vmatpush1.msra.mxu0 %v25
  %205 = vmatprep.subr.mxu0 0.0
  %206 = vmatpush1.msra.mxu0 %v24
  %207 = vmatprep.subr.mxu0 0.0
  %208 = vmatpush1.msra.mxu0 %v23
  %209 = vmatprep.subr.mxu0 0.0
  %210 = vmatpush1.msra.mxu0 %v22
  %211 = vmatprep.subr.mxu0 0.0
  %212 = vmatpush1.msra.mxu0 %v21
  %213 = vmatprep.subr.mxu0 0.0
  %214 = vmatpush1.msra.mxu0 %v20
  %215 = vmatprep.subr.mxu0 0.0
  %216 = vmatpush1.msra.mxu0 %v19
  %217 = vmatprep.subr.mxu0 0.0
  %218 = vmatpush1.msra.mxu0 %v18
  %219 = vmatprep.subr.mxu0 0.0
  %220 = vmatpush1.msra.mxu0 %v17
  %221 = vmatprep.subr.mxu0 0.0
  %222 = vmatpush1.msra.mxu0 %v16
  %223 = vmatprep.subr.mxu0 0.0
  %224 = vmatpush2.msra.mxu0 0.0
  %225 = vmatprep.subr.mxu0 0.0
  %226 = vmatpush2.msra.mxu0 0.0
  %227 = vmatprep.subr.mxu0 0.0
  %228 = vmatpush2.msra.mxu0 0.0
  %229 = vmatprep.subr.mxu0 0.0
  %230 = vmatpush2.msra.mxu0 0.0
  %231 = vmatprep.subr.mxu0 0.0
  %232 = vmatpush2.msra.mxu0 0.0
  %233 = vmatprep.subr.mxu0 0.0
  %234 = vmatpush2.msra.mxu0 0.0
  %235 = vmatprep.subr.mxu0 0.0
  %236 = vmatpush2.msra.mxu0 0.0
  %237 = vmatprep.subr.mxu0 0.0
  %238 = vmatpush2.msra.mxu0 0.0
  %239 = vmatprep.subr.mxu0 0.0
  %240 = vmatpush2.msra.mxu0 0.0
  %241 = vmatprep.subr.mxu0 0.0
  %242 = vmatpush2.msra.mxu0 0.0
  %243 = vmatprep.subr.mxu0 0.0
  %244 = vmatpush2.msra.mxu0 0.0
  %245 = vmatprep.subr.mxu0 0.0
  %246 = vmatpush2.msra.mxu0 0.0
  %247 = vmatprep.subr.mxu0 0.0
  %248 = vmatpush2.msra.mxu0 0.0
  %249 = vmatprep.subr.mxu0 0.0
  %250 = vmatpush2.msra.mxu0 0.0
  %251 = vmatprep.subr.mxu0 0.0
  %252 = vmatpush2.msra.mxu0 0.0
  %253 = vmatprep.subr.mxu0 0.0
  %254 = vmatpush2.msra.mxu0 0.0
  %255 = vmatprep.mubr.f32.mxu0 0.0
  %256 = vmatmul.mubr.f32.gmra.mxu0 %v186
  %v257 = vpop.f32.mrf.mxu0
  %v258 = vadd.f32 0.0, %v257
  %v259 = vpop.f32.mrf.mxu0
  %260 = vdwg.mxu0
  %v261 = vadd.f32 %v190, %v258
  %v262 = vmax.f32 %v261, 0.0
  %v263 = vmul.f32 %v186, 0.9
  %v264 = vmul.f32 %v262, 0.1
  %v265 = vadd.f32 %v263, %v264
  %s266 = scalar_lea.vmem %s2, 16
  %267 = vst [vmem:[%s266] sm:$0xff] %v265
  %s268 = scalar_lea.vmem %s0, 24
  %v269 = vld [vmem:[%s268] sm:$0xff]
  %270 = vmatprep.subr.mxu0 0.0
  %271 = vmatpush1.msra.mxu0 %v31
  %272 = vmatprep.subr.mxu0 0.0
  %273 = vmatpush1.msra.mxu0 %v30
  %274 = vmatprep.subr.mxu0 0.0
  %275 = vmatpush1.msra.mxu0 %v29
  %276 = vmatprep.subr.mxu0 0.0
  %277 = vmatpush1.msra.mxu0 %v28
  %278 = vmatprep.subr.mxu0 0.0
  %279 = vmatpush1.msra.mxu0 %v27
  %280 = vmatprep.subr.mxu0 0.0
  %281 = vmatpush1.msra.mxu0 %v26
  %282 = vmatprep.subr.mxu0 0.0
  %283 = vmatpush1.msra.mxu0 %v25
  %284 = vmatprep.subr.mxu0 0.0
  %285 = vmatpush1.msra.mxu0 %v24
  %286 = vmatprep.subr.mxu0 0.0
  %287 = vmatpush1.msra.mxu0 %v23
  %288 = vmatprep.subr.mxu0 0.0
  %289 = vmatpush1.msra.mxu0 %v22
  %290 = vmatprep.subr.mxu0 0.0
  %291 = vmatpush1.msra.mxu0 %v21
  %292 = vmatprep.subr.mxu0 0.0
  %293 = vmatpush1.msra.mxu0 %v20
  %294 = vmatprep.subr.mxu0 0.0
  %295 = vmatpush1.msra.mxu0 %v19
  %296 = vmatprep.subr.mxu0 0.0
  %297 = vmatpush1.msra.mxu0 %v18
  %298 = vmatprep.subr.mxu0 0.0
  %299 = vmatpush1.msra.mxu0 %v17
  %300 = vmatprep.subr.mxu0 0.0
  %301 = vmatpush1.msra.mxu0 %v16
  %302 = vmatprep.subr.mxu0 0.0
  %303 = vmatpush2.msra.mxu0 0.0
  %304 = vmatprep.subr.mxu0 0.0
  %305 = vmatpush2.msra.mxu0 0.0
  %306 = vmatprep.subr.mxu0 0.0
  %307 = vmatpush2.msra.mxu0 0.0
  %308 = vmatprep.subr.mxu0 0.0
  %309 = vmatpush2.msra.mxu0 0.0
  %310 = vmatprep.subr.mxu0 0.0
  %311 = vmatpush2.msra.mxu0 0.0
  %312 = vmatprep.subr.mxu0 0.0
  %313 = vmatpush2.msra.mxu0 0.0
  %314 = vmatprep.subr.mxu0 0.0
  %315 = vmatpush2.msra.mxu0 0.0
  %316 = vmatprep.subr.mxu0 0.0
  %317 = vmatpush2.msra.mxu0 0.0
  %318 = vmatprep.subr.mxu0 0.0
  %319 = vmatpush2.msra.mxu0 0.0
  %320 = vmatprep.subr.mxu0 0.0
  %321 = vmatpush2.msra.mxu0 0.0
  %322 = vmatprep.subr.mxu0 0.0
  %323 = vmatpush2.msra.mxu0 0.0
  %324 = vmatprep.subr.mxu0 0.0
  %325 = vmatpush2.msra.mxu0 0.0
  %326 = vmatprep.subr.mxu0 0.0
  %327 = vmatpush2.msra.mxu0 0.0
  %328 = vmatprep.subr.mxu0 0.0
  %329 = vmatpush2.msra.mxu0 0.0
  %330 = vmatprep.subr.mxu0 0.0
  %331 = vmatpush2.msra.mxu0 0.0
  %332 = vmatprep.subr.mxu0 0.0
  %333 = vmatpush2.msra.mxu0 0.0
  %334 = vmatprep.mubr.f32.mxu0 0.0
  %335 = vmatmul.mubr.f32.gmra.mxu0 %v265
  %v336 = vpop.f32.mrf.mxu0
  %v337 = vadd.f32 0.0, %v336
  %v338 = vpop.f32.mrf.mxu0
  %339 = vdwg.mxu0
  %v340 = vadd.f32 %v269, %v337
  %v341 = vmax.f32 %v340, 0.0
  %v342 = vmul.f32 %v265, 0.9
  %v343 = vmul.f32 %v341, 0.1
  %v344 = vadd.f32 %v342, %v343
  %s345 = scalar_lea.vmem %s2, 24
  %346 = vst [vmem:[%s345] sm:$0xff] %v344
  %s347 = scalar_lea.vmem %s0, 32
  %v348 = vld [vmem:[%s347] sm:$0xff]
  %349 = vmatprep.subr.mxu0 0.0
  %350 = vmatpush1.msra.mxu0 %v31
  %351 = vmatprep.subr.mxu0 0.0
  %352 = vmatpush1.msra.mxu0 %v30
  %353 = vmatprep.subr.mxu0 0.0
  %354 = vmatpush1.msra.mxu0 %v29
  %355 = vmatprep.subr.mxu0 0.0
  %356 = vmatpush1.msra.mxu0 %v28
  %357 = vmatprep.subr.mxu0 0.0
  %358 = vmatpush1.msra.mxu0 %v27
  %359 = vmatprep.subr.mxu0 0.0
  %360 = vmatpush1.msra.mxu0 %v26
  %361 = vmatprep.subr.mxu0 0.0
  %362 = vmatpush1.msra.mxu0 %v25
  %363 = vmatprep.subr.mxu0 0.0
  %364 = vmatpush1.msra.mxu0 %v24
  %365 = vmatprep.subr.mxu0 0.0
  %366 = vmatpush1.msra.mxu0 %v23
  %367 = vmatprep.subr.mxu0 0.0
  %368 = vmatpush1.msra.mxu0 %v22
  %369 = vmatprep.subr.mxu0 0.0
  %370 = vmatpush1.msra.mxu0 %v21
  %371 = vmatprep.subr.mxu0 0.0
  %372 = vmatpush1.msra.mxu0 %v20
  %373 = vmatprep.subr.mxu0 0.0
  %374 = vmatpush1.msra.mxu0 %v19
  %375 = vmatprep.subr.mxu0 0.0
  %376 = vmatpush1.msra.mxu0 %v18
  %377 = vmatprep.subr.mxu0 0.0
  %378 = vmatpush1.msra.mxu0 %v17
  %379 = vmatprep.subr.mxu0 0.0
  %380 = vmatpush1.msra.mxu0 %v16
  %381 = vmatprep.subr.mxu0 0.0
  %382 = vmatpush2.msra.mxu0 0.0
  %383 = vmatprep.subr.mxu0 0.0
  %384 = vmatpush2.msra.mxu0 0.0
  %385 = vmatprep.subr.mxu0 0.0
  %386 = vmatpush2.msra.mxu0 0.0
  %387 = vmatprep.subr.mxu0 0.0
  %388 = vmatpush2.msra.mxu0 0.0
  %389 = vmatprep.subr.mxu0 0.0
  %390 = vmatpush2.msra.mxu0 0.0
  %391 = vmatprep.subr.mxu0 0.0
  %392 = vmatpush2.msra.mxu0 0.0
  %393 = vmatprep.subr.mxu0 0.0
  %394 = vmatpush2.msra.mxu0 0.0
  %395 = vmatprep.subr.mxu0 0.0
  %396 = vmatpush2.msra.mxu0 0.0
  %397 = vmatprep.subr.mxu0 0.0
  %398 = vmatpush2.msra.mxu0 0.0
  %399 = vmatprep.subr.mxu0 0.0
  %400 = vmatpush2.msra.mxu0 0.0
  %401 = vmatprep.subr.mxu0 0.0
  %402 = vmatpush2.msra.mxu0 0.0
  %403 = vmatprep.subr.mxu0 0.0
  %404 = vmatpush2.msra.mxu0 0.0
  %405 = vmatprep.subr.mxu0 0.0
  %406 = vmatpush2.msra.mxu0 0.0
  %407 = vmatprep.subr.mxu0 0.0
  %408 = vmatpush2.msra.mxu0 0.0
  %409 = vmatprep.subr.mxu0 0.0
  %410 = vmatpush2.msra.mxu0 0.0
  %411 = vmatprep.subr.mxu0 0.0
  %412 = vmatpush2.msra.mxu0 0.0
  %413 = vmatprep.mubr.f32.mxu0 0.0
  %414 = vmatmul.mubr.f32.gmra.mxu0 %v344
  %v415 = vpop.f32.mrf.mxu0
  %v416 = vadd.f32 0.0, %v415
  %v417 = vpop.f32.mrf.mxu0
  %418 = vdwg.mxu0
  %v419 = vadd.f32 %v348, %v416
  %v420 = vmax.f32 %v419, 0.0
  %v421 = vmul.f32 %v344, 0.9
  %v422 = vmul.f32 %v420, 0.1
  %v423 = vadd.f32 %v421, %v422
  %s424 = scalar_lea.vmem %s2, 32
  %425 = vst [vmem:[%s424] sm:$0xff] %v423
  %s426 = scalar_lea.vmem %s0, 40
  %v427 = vld [vmem:[%s426] sm:$0xff]
  %428 = vmatprep.subr.mxu0 0.0
  %429 = vmatpush1.msra.mxu0 %v31
  %430 = vmatprep.subr.mxu0 0.0
  %431 = vmatpush1.msra.mxu0 %v30
  %432 = vmatprep.subr.mxu0 0.0
  %433 = vmatpush1.msra.mxu0 %v29
  %434 = vmatprep.subr.mxu0 0.0
  %435 = vmatpush1.msra.mxu0 %v28
  %436 = vmatprep.subr.mxu0 0.0
  %437 = vmatpush1.msra.mxu0 %v27
  %438 = vmatprep.subr.mxu0 0.0
  %439 = vmatpush1.msra.mxu0 %v26
  %440 = vmatprep.subr.mxu0 0.0
  %441 = vmatpush1.msra.mxu0 %v25
  %442 = vmatprep.subr.mxu0 0.0
  %443 = vmatpush1.msra.mxu0 %v24
  %444 = vmatprep.subr.mxu0 0.0
  %445 = vmatpush1.msra.mxu0 %v23
  %446 = vmatprep.subr.mxu0 0.0
  %447 = vmatpush1.msra.mxu0 %v22
  %448 = vmatprep.subr.mxu0 0.0
  %449 = vmatpush1.msra.mxu0 %v21
  %450 = vmatprep.subr.mxu0 0.0
  %451 = vmatpush1.msra.mxu0 %v20
  %452 = vmatprep.subr.mxu0 0.0
  %453 = vmatpush1.msra.mxu0 %v19
  %454 = vmatprep.subr.mxu0 0.0
  %455 = vmatpush1.msra.mxu0 %v18
  %456 = vmatprep.subr.mxu0 0.0
  %457 = vmatpush1.msra.mxu0 %v17
  %458 = vmatprep.subr.mxu0 0.0
  %459 = vmatpush1.msra.mxu0 %v16
  %460 = vmatprep.subr.mxu0 0.0
  %461 = vmatpush2.msra.mxu0 0.0
  %462 = vmatprep.subr.mxu0 0.0
  %463 = vmatpush2.msra.mxu0 0.0
  %464 = vmatprep.subr.mxu0 0.0
  %465 = vmatpush2.msra.mxu0 0.0
  %466 = vmatprep.subr.mxu0 0.0
  %467 = vmatpush2.msra.mxu0 0.0
  %468 = vmatprep.subr.mxu0 0.0
  %469 = vmatpush2.msra.mxu0 0.0
  %470 = vmatprep.subr.mxu0 0.0
  %471 = vmatpush2.msra.mxu0 0.0
  %472 = vmatprep.subr.mxu0 0.0
  %473 = vmatpush2.msra.mxu0 0.0
  %474 = vmatprep.subr.mxu0 0.0
  %475 = vmatpush2.msra.mxu0 0.0
  %476 = vmatprep.subr.mxu0 0.0
  %477 = vmatpush2.msra.mxu0 0.0
  %478 = vmatprep.subr.mxu0 0.0
  %479 = vmatpush2.msra.mxu0 0.0
  %480 = vmatprep.subr.mxu0 0.0
  %481 = vmatpush2.msra.mxu0 0.0
  %482 = vmatprep.subr.mxu0 0.0
  %483 = vmatpush2.msra.mxu0 0.0
  %484 = vmatprep.subr.mxu0 0.0
  %485 = vmatpush2.msra.mxu0 0.0
  %486 = vmatprep.subr.mxu0 0.0
  %487 = vmatpush2.msra.mxu0 0.0
  %488 = vmatprep.subr.mxu0 0.0
  %489 = vmatpush2.msra.mxu0 0.0
  %490 = vmatprep.subr.mxu0 0.0
  %491 = vmatpush2.msra.mxu0 0.0
  %492 = vmatprep.mubr.f32.mxu0 0.0
  %493 = vmatmul.mubr.f32.gmra.mxu0 %v423
  %v494 = vpop.f32.mrf.mxu0
  %v495 = vadd.f32 0.0, %v494
  %v496 = vpop.f32.mrf.mxu0
  %497 = vdwg.mxu0
  %v498 = vadd.f32 %v427, %v495
  %v499 = vmax.f32 %v498, 0.0
  %v500 = vmul.f32 %v423, 0.9
  %v501 = vmul.f32 %v499, 0.1
  %v502 = vadd.f32 %v500, %v501
  %s503 = scalar_lea.vmem %s2, 40
  %504 = vst [vmem:[%s503] sm:$0xff] %v502
  %s505 = scalar_lea.vmem %s0, 48
  %v506 = vld [vmem:[%s505] sm:$0xff]
  %507 = vmatprep.subr.mxu0 0.0
  %508 = vmatpush1.msra.mxu0 %v31
  %509 = vmatprep.subr.mxu0 0.0
  %510 = vmatpush1.msra.mxu0 %v30
  %511 = vmatprep.subr.mxu0 0.0
  %512 = vmatpush1.msra.mxu0 %v29
  %513 = vmatprep.subr.mxu0 0.0
  %514 = vmatpush1.msra.mxu0 %v28
  %515 = vmatprep.subr.mxu0 0.0
  %516 = vmatpush1.msra.mxu0 %v27
  %517 = vmatprep.subr.mxu0 0.0
  %518 = vmatpush1.msra.mxu0 %v26
  %519 = vmatprep.subr.mxu0 0.0
  %520 = vmatpush1.msra.mxu0 %v25
  %521 = vmatprep.subr.mxu0 0.0
  %522 = vmatpush1.msra.mxu0 %v24
  %523 = vmatprep.subr.mxu0 0.0
  %524 = vmatpush1.msra.mxu0 %v23
  %525 = vmatprep.subr.mxu0 0.0
  %526 = vmatpush1.msra.mxu0 %v22
  %527 = vmatprep.subr.mxu0 0.0
  %528 = vmatpush1.msra.mxu0 %v21
  %529 = vmatprep.subr.mxu0 0.0
  %530 = vmatpush1.msra.mxu0 %v20
  %531 = vmatprep.subr.mxu0 0.0
  %532 = vmatpush1.msra.mxu0 %v19
  %533 = vmatprep.subr.mxu0 0.0
  %534 = vmatpush1.msra.mxu0 %v18
  %535 = vmatprep.subr.mxu0 0.0
  %536 = vmatpush1.msra.mxu0 %v17
  %537 = vmatprep.subr.mxu0 0.0
  %538 = vmatpush1.msra.mxu0 %v16
  %539 = vmatprep.subr.mxu0 0.0
  %540 = vmatpush2.msra.mxu0 0.0
  %541 = vmatprep.subr.mxu0 0.0
  %542 = vmatpush2.msra.mxu0 0.0
  %543 = vmatprep.subr.mxu0 0.0
  %544 = vmatpush2.msra.mxu0 0.0
  %545 = vmatprep.subr.mxu0 0.0
  %546 = vmatpush2.msra.mxu0 0.0
  %547 = vmatprep.subr.mxu0 0.0
  %548 = vmatpush2.msra.mxu0 0.0
  %549 = vmatprep.subr.mxu0 0.0
  %550 = vmatpush2.msra.mxu0 0.0
  %551 = vmatprep.subr.mxu0 0.0
  %552 = vmatpush2.msra.mxu0 0.0
  %553 = vmatprep.subr.mxu0 0.0
  %554 = vmatpush2.msra.mxu0 0.0
  %555 = vmatprep.subr.mxu0 0.0
  %556 = vmatpush2.msra.mxu0 0.0
  %557 = vmatprep.subr.mxu0 0.0
  %558 = vmatpush2.msra.mxu0 0.0
  %559 = vmatprep.subr.mxu0 0.0
  %560 = vmatpush2.msra.mxu0 0.0
  %561 = vmatprep.subr.mxu0 0.0
  %562 = vmatpush2.msra.mxu0 0.0
  %563 = vmatprep.subr.mxu0 0.0
  %564 = vmatpush2.msra.mxu0 0.0
  %565 = vmatprep.subr.mxu0 0.0
  %566 = vmatpush2.msra.mxu0 0.0
  %567 = vmatprep.subr.mxu0 0.0
  %568 = vmatpush2.msra.mxu0 0.0
  %569 = vmatprep.subr.mxu0 0.0
  %570 = vmatpush2.msra.mxu0 0.0
  %571 = vmatprep.mubr.f32.mxu0 0.0
  %572 = vmatmul.mubr.f32.gmra.mxu0 %v502
  %v573 = vpop.f32.mrf.mxu0
  %v574 = vadd.f32 0.0, %v573
  %v575 = vpop.f32.mrf.mxu0
  %576 = vdwg.mxu0
  %v577 = vadd.f32 %v506, %v574
  %v578 = vmax.f32 %v577, 0.0
  %v579 = vmul.f32 %v502, 0.9
  %v580 = vmul.f32 %v578, 0.1
  %v581 = vadd.f32 %v579, %v580
  %s582 = scalar_lea.vmem %s2, 48
  %583 = vst [vmem:[%s582] sm:$0xff] %v581
  %s584 = scalar_lea.vmem %s0, 56
  %v585 = vld [vmem:[%s584] sm:$0xff]
  %586 = vmatprep.subr.mxu0 0.0
  %587 = vmatpush1.msra.mxu0 %v31
  %588 = vmatprep.subr.mxu0 0.0
  %589 = vmatpush1.msra.mxu0 %v30
  %590 = vmatprep.subr.mxu0 0.0
  %591 = vmatpush1.msra.mxu0 %v29
  %592 = vmatprep.subr.mxu0 0.0
  %593 = vmatpush1.msra.mxu0 %v28
  %594 = vmatprep.subr.mxu0 0.0
  %595 = vmatpush1.msra.mxu0 %v27
  %596 = vmatprep.subr.mxu0 0.0
  %597 = vmatpush1.msra.mxu0 %v26
  %598 = vmatprep.subr.mxu0 0.0
  %599 = vmatpush1.msra.mxu0 %v25
  %600 = vmatprep.subr.mxu0 0.0
  %601 = vmatpush1.msra.mxu0 %v24
  %602 = vmatprep.subr.mxu0 0.0
  %603 = vmatpush1.msra.mxu0 %v23
  %604 = vmatprep.subr.mxu0 0.0
  %605 = vmatpush1.msra.mxu0 %v22
  %606 = vmatprep.subr.mxu0 0.0
  %607 = vmatpush1.msra.mxu0 %v21
  %608 = vmatprep.subr.mxu0 0.0
  %609 = vmatpush1.msra.mxu0 %v20
  %610 = vmatprep.subr.mxu0 0.0
  %611 = vmatpush1.msra.mxu0 %v19
  %612 = vmatprep.subr.mxu0 0.0
  %613 = vmatpush1.msra.mxu0 %v18
  %614 = vmatprep.subr.mxu0 0.0
  %615 = vmatpush1.msra.mxu0 %v17
  %616 = vmatprep.subr.mxu0 0.0
  %617 = vmatpush1.msra.mxu0 %v16
  %618 = vmatprep.subr.mxu0 0.0
  %619 = vmatpush2.msra.mxu0 0.0
  %620 = vmatprep.subr.mxu0 0.0
  %621 = vmatpush2.msra.mxu0 0.0
  %622 = vmatprep.subr.mxu0 0.0
  %623 = vmatpush2.msra.mxu0 0.0
  %624 = vmatprep.subr.mxu0 0.0
  %625 = vmatpush2.msra.mxu0 0.0
  %626 = vmatprep.subr.mxu0 0.0
  %627 = vmatpush2.msra.mxu0 0.0
  %628 = vmatprep.subr.mxu0 0.0
  %629 = vmatpush2.msra.mxu0 0.0
  %630 = vmatprep.subr.mxu0 0.0
  %631 = vmatpush2.msra.mxu0 0.0
  %632 = vmatprep.subr.mxu0 0.0
  %633 = vmatpush2.msra.mxu0 0.0
  %634 = vmatprep.subr.mxu0 0.0
  %635 = vmatpush2.msra.mxu0 0.0
  %636 = vmatprep.subr.mxu0 0.0
  %637 = vmatpush2.msra.mxu0 0.0
  %638 = vmatprep.subr.mxu0 0.0
  %639 = vmatpush2.msra.mxu0 0.0
  %640 = vmatprep.subr.mxu0 0.0
  %641 = vmatpush2.msra.mxu0 0.0
  %642 = vmatprep.subr.mxu0 0.0
  %643 = vmatpush2.msra.mxu0 0.0
  %644 = vmatprep.subr.mxu0 0.0
  %645 = vmatpush2.msra.mxu0 0.0
  %646 = vmatprep.subr.mxu0 0.0
  %647 = vmatpush2.msra.mxu0 0.0
  %648 = vmatprep.subr.mxu0 0.0
  %649 = vmatpush2.msra.mxu0 0.0
  %650 = vmatprep.mubr.f32.mxu0 0.0
  %651 = vmatmul.mubr.f32.gmra.mxu0 %v581
  %v652 = vpop.f32.mrf.mxu0
  %v653 = vadd.f32 0.0, %v652
  %v654 = vpop.f32.mrf.mxu0
  %655 = vdwg.mxu0
  %v656 = vadd.f32 %v585, %v653
  %v657 = vmax.f32 %v656, 0.0
  %v658 = vmul.f32 %v581, 0.9
  %v659 = vmul.f32 %v657, 0.1
  %v660 = vadd.f32 %v658, %v659
  %s661 = scalar_lea.vmem %s2, 56
  %662 = vst [vmem:[%s661] sm:$0xff] %v660
  %663 = vst [vmem:[#allocation2] sm:$0xff] %v660
  // Predicated region
  $region14: #{rnn_forward.1} parent=0 // pred_check
    _
  $region15: #{rnn_forward.1} parent=0 // pred_check_branch
    %665 = sbr.rel (0) target = $region17
  $region16: #{rnn_forward.1} parent=0 // pred_region
    _
  $region17: #{rnn_forward.1} parent=0 // pred_fallthru
    _
  // Predicated region
  $region18: #{rnn_forward.1} parent=0 // pred_check
    _
  $region19: #{rnn_forward.1} parent=0 // pred_check_branch
    %667 = sbr.rel (0) target = $region21
  $region20: #{rnn_forward.1} parent=0 // pred_region
    _
  $region21: #{rnn_forward.1} parent=0 // pred_fallthru
    _

</llo_original>
